<compile_context>
chip_gen: v7x
topology: tpu7x:2x2x1
jax: 0.10.0
libtpu: 0.0.40
codegen_flags: <defaults>
</compile_context>

<pallas_src>
import functools

import jax
import jax.numpy as jnp
from jax.experimental import pallas as pl
from jax.experimental.pallas import tpu as pltpu


# ----------------------------- Pallas kernel -------------------------------

def _fused_net_kernel(a_ref, x_ref,
                      w1_ref, b1_ref, w2_ref, b2_ref, w3_ref, b3_ref,
                      fw1_ref, fb1_ref, fw2_ref, fb2_ref, fw3_ref, fb3_ref,
                      o_ref):
    """Entire Net forward with everything resident in VMEM."""
    a = a_ref[...]
    y = x_ref[...]

    def gcn(y, w_ref, b_ref):
        xw = jnp.dot(y, w_ref[...], preferred_element_type=jnp.float32)
        h = jnp.dot(a, xw, preferred_element_type=jnp.float32) + b_ref[...]
        return jnp.maximum(h, 0.0)

    def linear(y, w_ref, b_ref, relu):
        h = jnp.dot(y, w_ref[...], preferred_element_type=jnp.float32) + b_ref[...]
        return jnp.maximum(h, 0.0) if relu else h

    y = gcn(y, w1_ref, b1_ref)
    y = gcn(y, w2_ref, b2_ref)
    y = gcn(y, w3_ref, b3_ref)
    y = linear(y, fw1_ref, fb1_ref, relu=True)
    y = linear(y, fw2_ref, fb2_ref, relu=True)
    y = linear(y, fw3_ref, fb3_ref, relu=False)   # lane-dense (padded to 128)

    o_ref[...] = y.astype(o_ref.dtype)


# ------------------------------ Wrappers -----------------------------------

def _vmem_spec():
    # Small problem: whole arrays live in VMEM as single blocks (no grid).
    return pl.BlockSpec(memory_space=pltpu.VMEM)


def prepare_params(raw):
    """One-time layout prep: transpose Linear weights to (in, out), reshape
    biases to (1, out), and zero-pad the final layer to a 128-wide output so
    the kernel's store is lane-dense."""
    num_classes = raw["fc3_w"].shape[0]
    c_pad = ((num_classes + 127) // 128) * 128

    fc3_w = raw["fc3_w"].T                                        # (H, C)
    fc3_w = jnp.pad(fc3_w, ((0, 0), (0, c_pad - num_classes)))    # (H, c_pad)
    fc3_b = jnp.pad(raw["fc3_b"], (0, c_pad - num_classes)).reshape(1, -1)

    return {
        "conv1_w": raw["conv1_w"], "conv1_b": raw["conv1_b"].reshape(1, -1),
        "conv2_w": raw["conv2_w"], "conv2_b": raw["conv2_b"].reshape(1, -1),
        "conv3_w": raw["conv3_w"], "conv3_b": raw["conv3_b"].reshape(1, -1),
        "fc1_w": raw["fc1_w"].T, "fc1_b": raw["fc1_b"].reshape(1, -1),
        "fc2_w": raw["fc2_w"].T, "fc2_b": raw["fc2_b"].reshape(1, -1),
        "fc3_w": fc3_w, "fc3_b": fc3_b,
    }, num_classes


def build_normalized_adjacency(edge_index, num_nodes):
    """Dense GCN-normalized adjacency: D^{-1/2} (A + I) D^{-1/2}.

    Matches PyG gcn_norm semantics more closely: duplicate edges keep their
    multiplicity (scatter-add) and self-loops of weight 1 are only added to
    nodes that do not already have one (add_remaining_self_loops)."""
    src, dst = edge_index[0], edge_index[1]
    a = jnp.zeros((num_nodes, num_nodes), jnp.float32)
    a = a.at[dst, src].add(1.0)                       # message flows src -> dst
    diag = jnp.diagonal(a)
    a = a + jnp.diag(jnp.where(diag == 0, 1.0, 0.0))  # remaining self loops
    deg = a.sum(axis=1)
    d_inv_sqrt = jnp.where(deg > 0, 1.0 / jnp.sqrt(deg), 0.0)
    return d_inv_sqrt[:, None] * a * d_inv_sqrt[None, :]


@functools.partial(jax.jit, static_argnames=("num_classes",))
def net_forward(prepped, x, a_hat, num_classes):
    n = x.shape[0]
    c_pad = prepped["fc3_w"].shape[1]
    out_padded = pl.pallas_call(
        _fused_net_kernel,
        out_shape=jax.ShapeDtypeStruct((n, c_pad), jnp.float32),
        in_specs=[_vmem_spec()] * 14,
        out_specs=_vmem_spec(),
    )(
        a_hat, x,
        prepped["conv1_w"], prepped["conv1_b"],
        prepped["conv2_w"], prepped["conv2_b"],
        prepped["conv3_w"], prepped["conv3_b"],
        prepped["fc1_w"], prepped["fc1_b"],
        prepped["fc2_w"], prepped["fc2_b"],
        prepped["fc3_w"], prepped["fc3_b"],
    )
    return out_padded[:, :num_classes]


# ------------------------------ Main ---------------------------------------

if __name__ == "__main__":
    # Small synthetic shapes consistent with the module.
    N_NODES = 16
    N_FEATURES = 32
    NUM_HIDDEN = 32
    NUM_CLASSES = 8
    N_EDGES = 48

    key = jax.random.PRNGKey(0)
    keys = jax.random.split(key, 12)

    # Deterministic synthetic graph inputs.
    x = jax.random.normal(keys[0], (N_NODES, N_FEATURES), jnp.float32)
    src = jax.random.randint(keys[1], (N_EDGES,), 0, N_NODES)
    dst = jax.random.randint(keys[2], (N_EDGES,), 0, N_NODES)
    edge_index = jnp.stack([src, dst], axis=0)

    a_hat = build_normalized_adjacency(edge_index, N_NODES)

    # Deterministic parameter init (shapes match the PyTorch module layouts).
    def w_init(k, shape):
        return 0.1 * jax.random.normal(k, shape, jnp.float32)

    raw_params = {
        # GCNConv weights: (in, out); bias: (out,)
        "conv1_w": w_init(keys[3], (N_FEATURES, NUM_HIDDEN)),
        "conv1_b": jnp.zeros((NUM_HIDDEN,), jnp.float32),
        "conv2_w": w_init(keys[4], (NUM_HIDDEN, NUM_HIDDEN)),
        "conv2_b": jnp.zeros((NUM_HIDDEN,), jnp.float32),
        "conv3_w": w_init(keys[5], (NUM_HIDDEN, NUM_HIDDEN)),
        "conv3_b": jnp.zeros((NUM_HIDDEN,), jnp.float32),
        # nn.Linear weights: (out, in); bias: (out,)
        "fc1_w": w_init(keys[6], (NUM_HIDDEN, NUM_HIDDEN)),
        "fc1_b": w_init(keys[7], (NUM_HIDDEN,)),
        "fc2_w": w_init(keys[8], (NUM_HIDDEN, NUM_HIDDEN)),
        "fc2_b": w_init(keys[9], (NUM_HIDDEN,)),
        "fc3_w": w_init(keys[10], (NUM_CLASSES, NUM_HIDDEN)),
        "fc3_b": w_init(keys[11], (NUM_CLASSES,)),
    }

    # One-time layout prep (transpose / reshape / pad) — NOT on the hot path.
    prepped, num_classes = prepare_params(raw_params)

    out = net_forward(prepped, x, a_hat, num_classes)
    jax.block_until_ready(out)
    assert out.shape == (N_NODES, NUM_CLASSES)

    # TODO(synk): train-time DropEdge (torch.bernoulli edge masking) is a
    # stochastic training-only branch; the deterministic eval path is
    # implemented here.
    print("KERNEL_OK")
</pallas_src>

<mosaic_0001>
module attributes {stable_mosaic.version = 11 : i64} {
  func.func @_fused_net_kernel(%arg0: memref<16x16xf32, #tpu.memory_space<vmem>>, %arg1: memref<16x32xf32, #tpu.memory_space<vmem>>, %arg2: memref<32x32xf32, #tpu.memory_space<vmem>>, %arg3: memref<1x32xf32, #tpu.memory_space<vmem>>, %arg4: memref<32x32xf32, #tpu.memory_space<vmem>>, %arg5: memref<1x32xf32, #tpu.memory_space<vmem>>, %arg6: memref<32x32xf32, #tpu.memory_space<vmem>>, %arg7: memref<1x32xf32, #tpu.memory_space<vmem>>, %arg8: memref<32x32xf32, #tpu.memory_space<vmem>>, %arg9: memref<1x32xf32, #tpu.memory_space<vmem>>, %arg10: memref<32x32xf32, #tpu.memory_space<vmem>>, %arg11: memref<1x32xf32, #tpu.memory_space<vmem>>, %arg12: memref<32x128xf32, #tpu.memory_space<vmem>>, %arg13: memref<1x128xf32, #tpu.memory_space<vmem>>, %arg14: memref<16x128xf32, #tpu.memory_space<vmem>>) attributes {dimension_semantics = [], scalar_prefetch = 0 : i64, scratch_operands = 0 : i64, tpu.core_type = #tpu.core_type<tc>} {
    %c0 = arith.constant 0 : index
    %c0_0 = arith.constant 0 : index
    %0 = vector.load %arg0[%c0, %c0_0] : memref<16x16xf32, #tpu.memory_space<vmem>>, vector<16x16xf32>
    %c0_1 = arith.constant 0 : index
    %c0_2 = arith.constant 0 : index
    %1 = vector.load %arg1[%c0_1, %c0_2] : memref<16x32xf32, #tpu.memory_space<vmem>>, vector<16x32xf32>
    %c0_3 = arith.constant 0 : index
    %c0_4 = arith.constant 0 : index
    %2 = vector.load %arg2[%c0_3, %c0_4] : memref<32x32xf32, #tpu.memory_space<vmem>>, vector<32x32xf32>
    %cst = arith.constant dense<0.000000e+00> : vector<16x32xf32>
    %3 = tpu.matmul %1, %2, %cst {dimension_numbers = #tpu.dot_dimension_numbers<[1], [0], [0], [1], [0, 0, 1, 1], [], []>} : vector<16x32xf32>, vector<32x32xf32>, vector<16x32xf32> -> vector<16x32xf32>
    %cst_5 = arith.constant dense<0.000000e+00> : vector<16x32xf32>
    %4 = tpu.matmul %0, %3, %cst_5 {dimension_numbers = #tpu.dot_dimension_numbers<[1], [0], [0], [1], [0, 0, 1, 1], [], []>} : vector<16x16xf32>, vector<16x32xf32>, vector<16x32xf32> -> vector<16x32xf32>
    %c0_6 = arith.constant 0 : index
    %c0_7 = arith.constant 0 : index
    %5 = vector.load %arg3[%c0_6, %c0_7] : memref<1x32xf32, #tpu.memory_space<vmem>>, vector<1x32xf32>
    %6 = vector.broadcast %5 : vector<1x32xf32> to vector<16x32xf32>
    %7 = arith.addf %4, %6 : vector<16x32xf32>
    %cst_8 = arith.constant 0.000000e+00 : f32
    %8 = vector.broadcast %cst_8 : f32 to vector<16x32xf32>
    %9 = arith.maximumf %7, %8 : vector<16x32xf32>
    %c0_9 = arith.constant 0 : index
    %c0_10 = arith.constant 0 : index
    %10 = vector.load %arg4[%c0_9, %c0_10] : memref<32x32xf32, #tpu.memory_space<vmem>>, vector<32x32xf32>
    %cst_11 = arith.constant dense<0.000000e+00> : vector<16x32xf32>
    %11 = tpu.matmul %9, %10, %cst_11 {dimension_numbers = #tpu.dot_dimension_numbers<[1], [0], [0], [1], [0, 0, 1, 1], [], []>} : vector<16x32xf32>, vector<32x32xf32>, vector<16x32xf32> -> vector<16x32xf32>
    %cst_12 = arith.constant dense<0.000000e+00> : vector<16x32xf32>
    %12 = tpu.matmul %0, %11, %cst_12 {dimension_numbers = #tpu.dot_dimension_numbers<[1], [0], [0], [1], [0, 0, 1, 1], [], []>} : vector<16x16xf32>, vector<16x32xf32>, vector<16x32xf32> -> vector<16x32xf32>
    %c0_13 = arith.constant 0 : index
    %c0_14 = arith.constant 0 : index
    %13 = vector.load %arg5[%c0_13, %c0_14] : memref<1x32xf32, #tpu.memory_space<vmem>>, vector<1x32xf32>
    %14 = vector.broadcast %13 : vector<1x32xf32> to vector<16x32xf32>
    %15 = arith.addf %12, %14 : vector<16x32xf32>
    %cst_15 = arith.constant 0.000000e+00 : f32
    %16 = vector.broadcast %cst_15 : f32 to vector<16x32xf32>
    %17 = arith.maximumf %15, %16 : vector<16x32xf32>
    %c0_16 = arith.constant 0 : index
    %c0_17 = arith.constant 0 : index
    %18 = vector.load %arg6[%c0_16, %c0_17] : memref<32x32xf32, #tpu.memory_space<vmem>>, vector<32x32xf32>
    %cst_18 = arith.constant dense<0.000000e+00> : vector<16x32xf32>
    %19 = tpu.matmul %17, %18, %cst_18 {dimension_numbers = #tpu.dot_dimension_numbers<[1], [0], [0], [1], [0, 0, 1, 1], [], []>} : vector<16x32xf32>, vector<32x32xf32>, vector<16x32xf32> -> vector<16x32xf32>
    %cst_19 = arith.constant dense<0.000000e+00> : vector<16x32xf32>
    %20 = tpu.matmul %0, %19, %cst_19 {dimension_numbers = #tpu.dot_dimension_numbers<[1], [0], [0], [1], [0, 0, 1, 1], [], []>} : vector<16x16xf32>, vector<16x32xf32>, vector<16x32xf32> -> vector<16x32xf32>
    %c0_20 = arith.constant 0 : index
    %c0_21 = arith.constant 0 : index
    %21 = vector.load %arg7[%c0_20, %c0_21] : memref<1x32xf32, #tpu.memory_space<vmem>>, vector<1x32xf32>
    %22 = vector.broadcast %21 : vector<1x32xf32> to vector<16x32xf32>
    %23 = arith.addf %20, %22 : vector<16x32xf32>
    %cst_22 = arith.constant 0.000000e+00 : f32
    %24 = vector.broadcast %cst_22 : f32 to vector<16x32xf32>
    %25 = arith.maximumf %23, %24 : vector<16x32xf32>
    %c0_23 = arith.constant 0 : index
    %c0_24 = arith.constant 0 : index
    %26 = vector.load %arg8[%c0_23, %c0_24] : memref<32x32xf32, #tpu.memory_space<vmem>>, vector<32x32xf32>
    %cst_25 = arith.constant dense<0.000000e+00> : vector<16x32xf32>
    %27 = tpu.matmul %25, %26, %cst_25 {dimension_numbers = #tpu.dot_dimension_numbers<[1], [0], [0], [1], [0, 0, 1, 1], [], []>} : vector<16x32xf32>, vector<32x32xf32>, vector<16x32xf32> -> vector<16x32xf32>
    %c0_26 = arith.constant 0 : index
    %c0_27 = arith.constant 0 : index
    %28 = vector.load %arg9[%c0_26, %c0_27] : memref<1x32xf32, #tpu.memory_space<vmem>>, vector<1x32xf32>
    %29 = vector.broadcast %28 : vector<1x32xf32> to vector<16x32xf32>
    %30 = arith.addf %27, %29 : vector<16x32xf32>
    %cst_28 = arith.constant 0.000000e+00 : f32
    %31 = vector.broadcast %cst_28 : f32 to vector<16x32xf32>
    %32 = arith.maximumf %30, %31 : vector<16x32xf32>
    %c0_29 = arith.constant 0 : index
    %c0_30 = arith.constant 0 : index
    %33 = vector.load %arg10[%c0_29, %c0_30] : memref<32x32xf32, #tpu.memory_space<vmem>>, vector<32x32xf32>
    %cst_31 = arith.constant dense<0.000000e+00> : vector<16x32xf32>
    %34 = tpu.matmul %32, %33, %cst_31 {dimension_numbers = #tpu.dot_dimension_numbers<[1], [0], [0], [1], [0, 0, 1, 1], [], []>} : vector<16x32xf32>, vector<32x32xf32>, vector<16x32xf32> -> vector<16x32xf32>
    %c0_32 = arith.constant 0 : index
    %c0_33 = arith.constant 0 : index
    %35 = vector.load %arg11[%c0_32, %c0_33] : memref<1x32xf32, #tpu.memory_space<vmem>>, vector<1x32xf32>
    %36 = vector.broadcast %35 : vector<1x32xf32> to vector<16x32xf32>
    %37 = arith.addf %34, %36 : vector<16x32xf32>
    %cst_34 = arith.constant 0.000000e+00 : f32
    %38 = vector.broadcast %cst_34 : f32 to vector<16x32xf32>
    %39 = arith.maximumf %37, %38 : vector<16x32xf32>
    %c0_35 = arith.constant 0 : index
    %c0_36 = arith.constant 0 : index
    %40 = vector.load %arg12[%c0_35, %c0_36] : memref<32x128xf32, #tpu.memory_space<vmem>>, vector<32x128xf32>
    %cst_37 = arith.constant dense<0.000000e+00> : vector<16x128xf32>
    %41 = tpu.matmul %39, %40, %cst_37 {dimension_numbers = #tpu.dot_dimension_numbers<[1], [0], [0], [1], [0, 0, 1, 1], [], []>} : vector<16x32xf32>, vector<32x128xf32>, vector<16x128xf32> -> vector<16x128xf32>
    %c0_38 = arith.constant 0 : index
    %c0_39 = arith.constant 0 : index
    %42 = vector.load %arg13[%c0_38, %c0_39] : memref<1x128xf32, #tpu.memory_space<vmem>>, vector<1x128xf32>
    %43 = vector.broadcast %42 : vector<1x128xf32> to vector<16x128xf32>
    %44 = arith.addf %41, %43 : vector<16x128xf32>
    %c0_40 = arith.constant 0 : index
    %c0_41 = arith.constant 0 : index
    %45 = vector.load %arg14[%c0_40, %c0_41] : memref<16x128xf32, #tpu.memory_space<vmem>>, vector<16x128xf32>
    tpu.vector_store %arg14[%c0_40, %c0_41], %44 {strides = array<i32>} : memref<16x128xf32, #tpu.memory_space<vmem>>, vector<16x128xf32>,
    return
  }
}

</mosaic_0001>

<llo_original>
// kernel: net_forward.1
$region0: #{net_forward.1}
  #allocation0 [shape = 'u32[]', space=smem, size = 0x4, offset = 0x4, fixed_abs, tag = 'smem constant byte address 0x4 - core index']
  #allocation1 [shape = 'u32[144,128]{1,0:T(1,128)}', space=vmem, size = 0x12000, scoped, tag = 'internal scratch']
  %s0 = inlined_call_operand.vmem [shape: f32[16,16], index: 0, kind: input, shape index: {}]
  %s1 = inlined_call_operand.hbm [shape: f32[16,32], index: 1, kind: input, shape index: {}]
  %s2 = inlined_call_operand.hbm [shape: f32[32,32], index: 2, kind: input, shape index: {}]
  %s3 = inlined_call_operand.hbm [shape: f32[1,32], index: 3, kind: input, shape index: {}]
  %s4 = inlined_call_operand.hbm [shape: f32[32,32], index: 4, kind: input, shape index: {}]
  %s5 = inlined_call_operand.vmem [shape: f32[1,32], index: 5, kind: input, shape index: {}]
  %s6 = inlined_call_operand.hbm [shape: f32[32,32], index: 6, kind: input, shape index: {}]
  %s7 = inlined_call_operand.hbm [shape: f32[1,32], index: 7, kind: input, shape index: {}]
  %s8 = inlined_call_operand.hbm [shape: f32[32,32], index: 8, kind: input, shape index: {}]
  %s9 = inlined_call_operand.hbm [shape: f32[1,32], index: 9, kind: input, shape index: {}]
  %s10 = inlined_call_operand.vmem [shape: f32[32,32], index: 10, kind: input, shape index: {}]
  %s11 = inlined_call_operand.hbm [shape: f32[1,32], index: 11, kind: input, shape index: {}]
  %s12 = inlined_call_operand.hbm [shape: f32[32,128], index: 12, kind: input, shape index: {}]
  %s13 = inlined_call_operand.hbm [shape: f32[1,128], index: 13, kind: input, shape index: {}]
  %s14 = inlined_call_operand.vmem [shape: f32[16,128], index: 14, kind: output, shape index: {}]
  %s15 = sld [smem:[#allocation0]]
  $region110: #{net_forward.1} parent=0
    _
  %s17 = ssub.s32 1, %s15
  %s18 = scalar_select 0, %s17, %s15
  $region1: #{net_forward.1} parent=0
    #allocation2 [shape = 'u8[8192]{0}', space=vmem, size = 0x2000, scoped, tag = 'input window, operand 1, single buffered']
    #allocation3 [shape = 's32[1]{0}', space=sflag, size = 0x4, scoped, tag = 'scoped memory for net_forward.1']
    #allocation4 [shape = 'u8[16384]{0}', space=vmem, size = 0x4000, scoped, tag = 'input window, operand 2, single buffered']
    #allocation5 [shape = 's32[1]{0}', space=sflag, size = 0x4, scoped, tag = 'scoped memory for net_forward.1']
    #allocation6 [shape = 'u8[512]{0}', space=vmem, size = 0x400, scoped, tag = 'input window, operand 3, single buffered']
    #allocation7 [shape = 'u8[16384]{0}', space=vmem, size = 0x4000, scoped, tag = 'input window, operand 4, single buffered']
    #allocation8 [shape = 's32[1]{0}', space=sflag, size = 0x4, scoped, tag = 'scoped memory for net_forward.1']
    #allocation9 [shape = 'u8[16384]{0}', space=vmem, size = 0x4000, scoped, tag = 'input window, operand 6, single buffered']
    #allocation10 [shape = 'u8[512]{0}', space=vmem, size = 0x400, scoped, tag = 'input window, operand 7, single buffered']
    #allocation11 [shape = 's32[1]{0}', space=sflag, size = 0x4, scoped, tag = 'scoped memory for net_forward.1']
    #allocation12 [shape = 'u8[16384]{0}', space=vmem, size = 0x4000, scoped, tag = 'input window, operand 8, single buffered']
    #allocation13 [shape = 'u8[512]{0}', space=vmem, size = 0x400, scoped, tag = 'input window, operand 9, single buffered']
    #allocation14 [shape = 's32[1]{0}', space=sflag, size = 0x4, scoped, tag = 'scoped memory for net_forward.1']
    #allocation15 [shape = 'u8[512]{0}', space=vmem, size = 0x400, scoped, tag = 'input window, operand 11, single buffered']
    #allocation16 [shape = 'u8[16384]{0}', space=vmem, size = 0x4000, scoped, tag = 'input window, operand 12, single buffered']
    #allocation17 [shape = 's32[1]{0}', space=sflag, size = 0x4, scoped, tag = 'scoped memory for net_forward.1']
    #allocation18 [shape = 'u8[512]{0}', space=vmem, size = 0x400, scoped, tag = 'input window, operand 13, single buffered']
    %19 = vsyncpa [#allocation3], 0
    %20 = vsyncpa [#allocation5], 0
    %21 = vsyncpa [#allocation8], 0
    %22 = vsyncpa [#allocation11], 0
    %23 = vsyncpa [#allocation14], 0
    %24 = vsyncpa [#allocation17], 0
    // Predicated region
    $region2: #{net_forward.1} parent=1 // pred_check
      _
    $region3: #{net_forward.1} parent=1 // pred_check_branch
      %26 = sbr.rel (0) target = $region5
    $region4: #{net_forward.1} parent=1 // pred_region
      _
    $region5: #{net_forward.1} parent=1 // pred_fallthru
      _
    // Predicated region
    $region6: #{net_forward.1} parent=1 // pred_check
      _
    $region7: #{net_forward.1} parent=1 // pred_check_branch
      %28 = sbr.rel (0) target = $region9
    $region8: #{net_forward.1} parent=1 // pred_region
      %s30 = ssub.s32 256, 256
      %31 = vsyncadd [#allocation3], %s30
      %s32 = sshll.u32 [#allocation2], 4
      %s33 = int_to_ptr.vmem [resolvable:$true] %s32
      %38 = dma.hbm_to_vmem [thread:$0]  %s1, 256, %s33, [#allocation3], 128, 128, 8
    $region9: #{net_forward.1} parent=1 // pred_fallthru
      _
    // Predicated region
    $region10: #{net_forward.1} parent=1 // pred_check
      _
    $region11: #{net_forward.1} parent=1 // pred_check_branch
      %40 = sbr.rel (0) target = $region13
    $region12: #{net_forward.1} parent=1 // pred_region
      %s42 = ssub.s32 512, 512
      %43 = vsyncadd [#allocation5], %s42
      %s44 = sshll.u32 [#allocation4], 4
      %s45 = int_to_ptr.vmem [resolvable:$true] %s44
      %50 = dma.hbm_to_vmem [thread:$0]  %s2, 512, %s45, [#allocation5], 128, 128, 8
    $region13: #{net_forward.1} parent=1 // pred_fallthru
      _
    // Predicated region
    $region14: #{net_forward.1} parent=1 // pred_check
      _
    $region15: #{net_forward.1} parent=1 // pred_check_branch
      %52 = sbr.rel (0) target = $region17
    $region16: #{net_forward.1} parent=1 // pred_region
      %s54 = ssub.s32 16, 16
      %55 = vsyncadd [#allocation5], %s54
      %s57 = sshll.u32 [#allocation6], 4
      %s58 = int_to_ptr.vmem [resolvable:$true] %s57
      %60 = dma.hbm_to_vmem [thread:$0]  %s3, 16, %s58, [#allocation5]
    $region17: #{net_forward.1} parent=1 // pred_fallthru
      _
    // Predicated region
    $region18: #{net_forward.1} parent=1 // pred_check
      _
    $region19: #{net_forward.1} parent=1 // pred_check_branch
      %62 = sbr.rel (0) target = $region21
    $region20: #{net_forward.1} parent=1 // pred_region
      %s64 = ssub.s32 512, 512
      %65 = vsyncadd [#allocation8], %s64
      %s66 = sshll.u32 [#allocation7], 4
      %s67 = int_to_ptr.vmem [resolvable:$true] %s66
      %72 = dma.hbm_to_vmem [thread:$0]  %s4, 512, %s67, [#allocation8], 128, 128, 8
    $region21: #{net_forward.1} parent=1 // pred_fallthru
      _
    // Predicated region
    $region22: #{net_forward.1} parent=1 // pred_check
      _
    $region23: #{net_forward.1} parent=1 // pred_check_branch
      %74 = sbr.rel (0) target = $region25
    $region24: #{net_forward.1} parent=1 // pred_region
      _
    $region25: #{net_forward.1} parent=1 // pred_fallthru
      _
    // Predicated region
    $region26: #{net_forward.1} parent=1 // pred_check
      _
    $region27: #{net_forward.1} parent=1 // pred_check_branch
      %76 = sbr.rel (0) target = $region29
    $region28: #{net_forward.1} parent=1 // pred_region
      %s78 = ssub.s32 512, 512
      %79 = vsyncadd [#allocation8], %s78
      %s80 = sshll.u32 [#allocation9], 4
      %s81 = int_to_ptr.vmem [resolvable:$true] %s80
      %86 = dma.hbm_to_vmem [thread:$0]  %s6, 512, %s81, [#allocation8], 128, 128, 8
    $region29: #{net_forward.1} parent=1 // pred_fallthru
      _
    // Predicated region
    $region30: #{net_forward.1} parent=1 // pred_check
      _
    $region31: #{net_forward.1} parent=1 // pred_check_branch
      %88 = sbr.rel (0) target = $region33
    $region32: #{net_forward.1} parent=1 // pred_region
      %s90 = ssub.s32 16, 16
      %91 = vsyncadd [#allocation11], %s90
      %s93 = sshll.u32 [#allocation10], 4
      %s94 = int_to_ptr.vmem [resolvable:$true] %s93
      %96 = dma.hbm_to_vmem [thread:$0]  %s7, 16, %s94, [#allocation11]
    $region33: #{net_forward.1} parent=1 // pred_fallthru
      _
    // Predicated region
    $region34: #{net_forward.1} parent=1 // pred_check
      _
    $region35: #{net_forward.1} parent=1 // pred_check_branch
      %98 = sbr.rel (0) target = $region37
    $region36: #{net_forward.1} parent=1 // pred_region
      %s100 = ssub.s32 512, 512
      %101 = vsyncadd [#allocation11], %s100
      %s102 = sshll.u32 [#allocation12], 4
      %s103 = int_to_ptr.vmem [resolvable:$true] %s102
      %108 = dma.hbm_to_vmem [thread:$0]  %s8, 512, %s103, [#allocation11], 128, 128, 8
    $region37: #{net_forward.1} parent=1 // pred_fallthru
      _
    // Predicated region
    $region38: #{net_forward.1} parent=1 // pred_check
      _
    $region39: #{net_forward.1} parent=1 // pred_check_branch
      %110 = sbr.rel (0) target = $region41
    $region40: #{net_forward.1} parent=1 // pred_region
      %s112 = ssub.s32 16, 16
      %113 = vsyncadd [#allocation14], %s112
      %s115 = sshll.u32 [#allocation13], 4
      %s116 = int_to_ptr.vmem [resolvable:$true] %s115
      %118 = dma.hbm_to_vmem [thread:$0]  %s9, 16, %s116, [#allocation14]
    $region41: #{net_forward.1} parent=1 // pred_fallthru
      _
    // Predicated region
    $region42: #{net_forward.1} parent=1 // pred_check
      _
    $region43: #{net_forward.1} parent=1 // pred_check_branch
      %120 = sbr.rel (0) target = $region45
    $region44: #{net_forward.1} parent=1 // pred_region
      _
    $region45: #{net_forward.1} parent=1 // pred_fallthru
      _
    // Predicated region
    $region46: #{net_forward.1} parent=1 // pred_check
      _
    $region47: #{net_forward.1} parent=1 // pred_check_branch
      %122 = sbr.rel (0) target = $region49
    $region48: #{net_forward.1} parent=1 // pred_region
      %s124 = ssub.s32 16, 16
      %125 = vsyncadd [#allocation14], %s124
      %s127 = sshll.u32 [#allocation15], 4
      %s128 = int_to_ptr.vmem [resolvable:$true] %s127
      %130 = dma.hbm_to_vmem [thread:$0]  %s11, 16, %s128, [#allocation14]
    $region49: #{net_forward.1} parent=1 // pred_fallthru
      _
    // Predicated region
    $region50: #{net_forward.1} parent=1 // pred_check
      _
    $region51: #{net_forward.1} parent=1 // pred_check_branch
      %132 = sbr.rel (0) target = $region53
    $region52: #{net_forward.1} parent=1 // pred_region
      %s134 = ssub.s32 512, 512
      %135 = vsyncadd [#allocation17], %s134
      %s136 = sshll.u32 [#allocation16], 4
      %s137 = int_to_ptr.vmem [resolvable:$true] %s136
      %142 = dma.hbm_to_vmem [thread:$0]  %s12, 512, %s137, [#allocation17], 128, 128, 8
    $region53: #{net_forward.1} parent=1 // pred_fallthru
      _
    // Predicated region
    $region54: #{net_forward.1} parent=1 // pred_check
      _
    $region55: #{net_forward.1} parent=1 // pred_check_branch
      %144 = sbr.rel (0) target = $region57
    $region56: #{net_forward.1} parent=1 // pred_region
      %s146 = ssub.s32 16, 16
      %147 = vsyncadd [#allocation17], %s146
      %s149 = sshll.u32 [#allocation18], 4
      %s150 = int_to_ptr.vmem [resolvable:$true] %s149
      %152 = dma.hbm_to_vmem [thread:$0]  %s13, 16, %s150, [#allocation17]
    $region57: #{net_forward.1} parent=1 // pred_fallthru
      _
    // Predicated region
    $region58: #{net_forward.1} parent=1 // pred_check
      _
    $region59: #{net_forward.1} parent=1 // pred_check_branch
      %154 = sbr.rel (0) target = $region61
    $region60: #{net_forward.1} parent=1 // pred_region
      %155 = dma.done [#allocation3], 256
    $region61: #{net_forward.1} parent=1 // pred_fallthru
      _
    // Predicated region
    $region62: #{net_forward.1} parent=1 // pred_check
      _
    $region63: #{net_forward.1} parent=1 // pred_check_branch
      %157 = sbr.rel (0) target = $region65
    $region64: #{net_forward.1} parent=1 // pred_region
      %158 = dma.done [#allocation5], 512
    $region65: #{net_forward.1} parent=1 // pred_fallthru
      _
    // Predicated region
    $region66: #{net_forward.1} parent=1 // pred_check
      _
    $region67: #{net_forward.1} parent=1 // pred_check_branch
      %160 = sbr.rel (0) target = $region69
    $region68: #{net_forward.1} parent=1 // pred_region
      %161 = dma.done [#allocation5], 16
    $region69: #{net_forward.1} parent=1 // pred_fallthru
      _
    // Predicated region
    $region70: #{net_forward.1} parent=1 // pred_check
      _
    $region71: #{net_forward.1} parent=1 // pred_check_branch
      %163 = sbr.rel (0) target = $region73
    $region72: #{net_forward.1} parent=1 // pred_region
      %164 = dma.done [#allocation8], 512
    $region73: #{net_forward.1} parent=1 // pred_fallthru
      _
    // Predicated region
    $region74: #{net_forward.1} parent=1 // pred_check
      _
    $region75: #{net_forward.1} parent=1 // pred_check_branch
      %166 = sbr.rel (0) target = $region77
    $region76: #{net_forward.1} parent=1 // pred_region
      %167 = dma.done [#allocation8], 512
    $region77: #{net_forward.1} parent=1 // pred_fallthru
      _
    // Predicated region
    $region78: #{net_forward.1} parent=1 // pred_check
      _
    $region79: #{net_forward.1} parent=1 // pred_check_branch
      %169 = sbr.rel (0) target = $region81
    $region80: #{net_forward.1} parent=1 // pred_region
      %170 = dma.done [#allocation11], 16
    $region81: #{net_forward.1} parent=1 // pred_fallthru
      _
    // Predicated region
    $region82: #{net_forward.1} parent=1 // pred_check
      _
    $region83: #{net_forward.1} parent=1 // pred_check_branch
      %172 = sbr.rel (0) target = $region85
    $region84: #{net_forward.1} parent=1 // pred_region
      %173 = dma.done [#allocation11], 512
    $region85: #{net_forward.1} parent=1 // pred_fallthru
      _
    // Predicated region
    $region86: #{net_forward.1} parent=1 // pred_check
      _
    $region87: #{net_forward.1} parent=1 // pred_check_branch
      %175 = sbr.rel (0) target = $region89
    $region88: #{net_forward.1} parent=1 // pred_region
      %176 = dma.done [#allocation14], 16
    $region89: #{net_forward.1} parent=1 // pred_fallthru
      _
    // Predicated region
    $region90: #{net_forward.1} parent=1 // pred_check
      _
    $region91: #{net_forward.1} parent=1 // pred_check_branch
      %178 = sbr.rel (0) target = $region93
    $region92: #{net_forward.1} parent=1 // pred_region
      %179 = dma.done [#allocation14], 16
    $region93: #{net_forward.1} parent=1 // pred_fallthru
      _
    // Predicated region
    $region94: #{net_forward.1} parent=1 // pred_check
      _
    $region95: #{net_forward.1} parent=1 // pred_check_branch
      %181 = sbr.rel (0) target = $region97
    $region96: #{net_forward.1} parent=1 // pred_region
      %182 = dma.done [#allocation17], 512
    $region97: #{net_forward.1} parent=1 // pred_fallthru
      _
    // Predicated region
    $region98: #{net_forward.1} parent=1 // pred_check
      _
    $region99: #{net_forward.1} parent=1 // pred_check_branch
      %184 = sbr.rel (0) target = $region101
    $region100: #{net_forward.1} parent=1 // pred_region
      %185 = dma.done [#allocation17], 16
    $region101: #{net_forward.1} parent=1 // pred_fallthru
      _
    %v186 = vld [vmem:[%s0] sm:$0xff]
    %v187 = vld [vmem:[%s0 + $0x8] sm:$0xff]
    %v188 = vld [vmem:[#allocation2] sm:$0xff]
    %v189 = vld [vmem:[#allocation2 + $0x8] sm:$0xff]
    %v190 = vld [vmem:[#allocation4] sm:$0xff]
    %v191 = vld [vmem:[#allocation4 + $0x8] sm:$0xff]
    %v192 = vld [vmem:[#allocation4 + $0x10] sm:$0xff]
    %v193 = vld [vmem:[#allocation4 + $0x18] sm:$0xff]
    %vm194 = vcmask 261120
    %v196 = vsel %vm194, %v188, 0
    %v199 = vsel %vm194, %v189, 0
    %201 = vmatprep.subr.mxu0 0.0
    %202 = vmatpush1.msra.mxu0 %v190
    %203 = vmatprep.subr.mxu0 0.0
    %204 = vmatpush1.msra.mxu0 %v191
    %205 = vmatprep.subr.mxu0 0.0
    %206 = vmatpush1.msra.mxu0 %v192
    %207 = vmatprep.subr.mxu0 0.0
    %208 = vmatpush1.msra.mxu0 %v193
    %209 = vmatprep.subr.mxu0 0.0
    %210 = vmatpush1.msra.mxu0 0.0
    %211 = vmatprep.subr.mxu0 0.0
    %212 = vmatpush1.msra.mxu0 0.0
    %213 = vmatprep.subr.mxu0 0.0
    %214 = vmatpush1.msra.mxu0 0.0
    %215 = vmatprep.subr.mxu0 0.0
    %216 = vmatpush1.msra.mxu0 0.0
    %217 = vmatprep.subr.mxu0 0.0
    %218 = vmatpush1.msra.mxu0 0.0
    %219 = vmatprep.subr.mxu0 0.0
    %220 = vmatpush1.msra.mxu0 0.0
    %221 = vmatprep.subr.mxu0 0.0
    %222 = vmatpush1.msra.mxu0 0.0
    %223 = vmatprep.subr.mxu0 0.0
    %224 = vmatpush1.msra.mxu0 0.0
    %225 = vmatprep.subr.mxu0 0.0
    %226 = vmatpush1.msra.mxu0 0.0
    %227 = vmatprep.subr.mxu0 0.0
    %228 = vmatpush1.msra.mxu0 0.0
    %229 = vmatprep.subr.mxu0 0.0
    %230 = vmatpush1.msra.mxu0 0.0
    %231 = vmatprep.subr.mxu0 0.0
    %232 = vmatpush1.msra.mxu0 0.0
    %233 = vmatprep.subr.mxu0 0.0
    %234 = vmatpush1.msra.mxu0 0.0
    %235 = vmatprep.subr.mxu0 0.0
    %236 = vmatpush1.msra.mxu0 0.0
    %237 = vmatprep.subr.mxu0 0.0
    %238 = vmatpush1.msra.mxu0 0.0
    %239 = vmatprep.subr.mxu0 0.0
    %240 = vmatpush1.msra.mxu0 0.0
    %241 = vmatprep.subr.mxu0 0.0
    %242 = vmatpush1.msra.mxu0 0.0
    %243 = vmatprep.subr.mxu0 0.0
    %244 = vmatpush1.msra.mxu0 0.0
    %245 = vmatprep.subr.mxu0 0.0
    %246 = vmatpush1.msra.mxu0 0.0
    %247 = vmatprep.subr.mxu0 0.0
    %248 = vmatpush1.msra.mxu0 0.0
    %249 = vmatprep.subr.mxu0 0.0
    %250 = vmatpush1.msra.mxu0 0.0
    %251 = vmatprep.subr.mxu0 0.0
    %252 = vmatpush1.msra.mxu0 0.0
    %253 = vmatprep.subr.mxu0 0.0
    %254 = vmatpush1.msra.mxu0 0.0
    %255 = vmatprep.subr.mxu0 0.0
    %256 = vmatpush1.msra.mxu0 0.0
    %257 = vmatprep.subr.mxu0 0.0
    %258 = vmatpush1.msra.mxu0 0.0
    %259 = vmatprep.subr.mxu0 0.0
    %260 = vmatpush1.msra.mxu0 0.0
    %261 = vmatprep.subr.mxu0 0.0
    %262 = vmatpush1.msra.mxu0 0.0
    %263 = vmatprep.subr.mxu0 0.0
    %264 = vmatpush1.msra.mxu0 0.0
    %265 = vmatprep.mubr.f32.mxu0 0.0
    %266 = vmatmul.mubr.f32.gmra.mrb[0].mxu0 %v196
    %v267 = vpop.f32.mrb[0].mxu0
    %v268 = vadd.f32 0.0, %v267
    %v269 = vpop.f32.mrb[0].mxu0
    %270 = vmatprep.mubr.f32.mxu0 0.0
    %271 = vmatmul.mubr.f32.gmra.mrb[0].mxu0 %v199
    %v272 = vpop.f32.mrb[0].mxu0
    %v273 = vadd.f32 0.0, %v272
    %v274 = vpop.f32.mrb[0].mxu0
    %275 = vdwg.mxu0
    %v276 = vld [vmem:[#allocation6] sm:$0x1]
    %v278 = vlaneseq
    %v279 = vshrl.u32 %v278, 7
    %v280 = vsub.s32 0, %v279
    %v281 = vrot.slane %v276, %v280
    %vm283 = vcmask 130048
    %v285 = vsel %vm283, %v186, 0
    %v288 = vsel %vm283, %v187, 0
    %290 = vmatprep.subr.mxu0 0.0
    %291 = vmatpush1.msra.mxu0 %v268
    %292 = vmatprep.subr.mxu0 0.0
    %293 = vmatpush1.msra.mxu0 %v273
    %294 = vmatprep.subr.mxu0 0.0
    %295 = vmatpush1.msra.mxu0 0.0
    %296 = vmatprep.subr.mxu0 0.0
    %297 = vmatpush1.msra.mxu0 0.0
    %298 = vmatprep.subr.mxu0 0.0
    %299 = vmatpush1.msra.mxu0 0.0
    %300 = vmatprep.subr.mxu0 0.0
    %301 = vmatpush1.msra.mxu0 0.0
    %302 = vmatprep.subr.mxu0 0.0
    %303 = vmatpush1.msra.mxu0 0.0
    %304 = vmatprep.subr.mxu0 0.0
    %305 = vmatpush1.msra.mxu0 0.0
    %306 = vmatprep.subr.mxu0 0.0
    %307 = vmatpush1.msra.mxu0 0.0
    %308 = vmatprep.subr.mxu0 0.0
    %309 = vmatpush1.msra.mxu0 0.0
    %310 = vmatprep.subr.mxu0 0.0
    %311 = vmatpush1.msra.mxu0 0.0
    %312 = vmatprep.subr.mxu0 0.0
    %313 = vmatpush1.msra.mxu0 0.0
    %314 = vmatprep.subr.mxu0 0.0
    %315 = vmatpush1.msra.mxu0 0.0
    %316 = vmatprep.subr.mxu0 0.0
    %317 = vmatpush1.msra.mxu0 0.0
    %318 = vmatprep.subr.mxu0 0.0
    %319 = vmatpush1.msra.mxu0 0.0
    %320 = vmatprep.subr.mxu0 0.0
    %321 = vmatpush1.msra.mxu0 0.0
    %322 = vmatprep.subr.mxu0 0.0
    %323 = vmatpush1.msra.mxu0 0.0
    %324 = vmatprep.subr.mxu0 0.0
    %325 = vmatpush1.msra.mxu0 0.0
    %326 = vmatprep.subr.mxu0 0.0
    %327 = vmatpush1.msra.mxu0 0.0
    %328 = vmatprep.subr.mxu0 0.0
    %329 = vmatpush1.msra.mxu0 0.0
    %330 = vmatprep.subr.mxu0 0.0
    %331 = vmatpush1.msra.mxu0 0.0
    %332 = vmatprep.subr.mxu0 0.0
    %333 = vmatpush1.msra.mxu0 0.0
    %334 = vmatprep.subr.mxu0 0.0
    %335 = vmatpush1.msra.mxu0 0.0
    %336 = vmatprep.subr.mxu0 0.0
    %337 = vmatpush1.msra.mxu0 0.0
    %338 = vmatprep.subr.mxu0 0.0
    %339 = vmatpush1.msra.mxu0 0.0
    %340 = vmatprep.subr.mxu0 0.0
    %341 = vmatpush1.msra.mxu0 0.0
    %342 = vmatprep.subr.mxu0 0.0
    %343 = vmatpush1.msra.mxu0 0.0
    %344 = vmatprep.subr.mxu0 0.0
    %345 = vmatpush1.msra.mxu0 0.0
    %346 = vmatprep.subr.mxu0 0.0
    %347 = vmatpush1.msra.mxu0 0.0
    %348 = vmatprep.subr.mxu0 0.0
    %349 = vmatpush1.msra.mxu0 0.0
    %350 = vmatprep.subr.mxu0 0.0
    %351 = vmatpush1.msra.mxu0 0.0
    %352 = vmatprep.subr.mxu0 0.0
    %353 = vmatpush1.msra.mxu0 0.0
    %354 = vmatprep.mubr.f32.mxu0 0.0
    %355 = vmatmul.mubr.f32.gmra.mrb[0].mxu0 %v285
    %v356 = vpop.f32.mrb[0].mxu0
    %v357 = vadd.f32 %v281, %v356
    %v358 = vpop.f32.mrb[0].mxu0
    %359 = vmatprep.mubr.f32.mxu0 0.0
    %360 = vmatmul.mubr.f32.gmra.mrb[0].mxu0 %v288
    %v361 = vpop.f32.mrb[0].mxu0
    %v362 = vadd.f32 %v281, %v361
    %v363 = vpop.f32.mrb[0].mxu0
    %364 = vdwg.mxu0
    %v365 = vmax.f32 %v357, 0.0
    %v366 = vmax.f32 %v362, 0.0
    %v367 = vld [vmem:[#allocation7] sm:$0xff]
    %v368 = vld [vmem:[#allocation7 + $0x8] sm:$0xff]
    %v369 = vld [vmem:[#allocation7 + $0x10] sm:$0xff]
    %v370 = vld [vmem:[#allocation7 + $0x18] sm:$0xff]
    %v372 = vsel %vm194, %v365, 0
    %v375 = vsel %vm194, %v366, 0
    %377 = vmatprep.subr.mxu0 0.0
    %378 = vmatpush1.msra.mxu0 %v367
    %379 = vmatprep.subr.mxu0 0.0
    %380 = vmatpush1.msra.mxu0 %v368
    %381 = vmatprep.subr.mxu0 0.0
    %382 = vmatpush1.msra.mxu0 %v369
    %383 = vmatprep.subr.mxu0 0.0
    %384 = vmatpush1.msra.mxu0 %v370
    %385 = vmatprep.subr.mxu0 0.0
    %386 = vmatpush1.msra.mxu0 0.0
    %387 = vmatprep.subr.mxu0 0.0
    %388 = vmatpush1.msra.mxu0 0.0
    %389 = vmatprep.subr.mxu0 0.0
    %390 = vmatpush1.msra.mxu0 0.0
    %391 = vmatprep.subr.mxu0 0.0
    %392 = vmatpush1.msra.mxu0 0.0
    %393 = vmatprep.subr.mxu0 0.0
    %394 = vmatpush1.msra.mxu0 0.0
    %395 = vmatprep.subr.mxu0 0.0
    %396 = vmatpush1.msra.mxu0 0.0
    %397 = vmatprep.subr.mxu0 0.0
    %398 = vmatpush1.msra.mxu0 0.0
    %399 = vmatprep.subr.mxu0 0.0
    %400 = vmatpush1.msra.mxu0 0.0
    %401 = vmatprep.subr.mxu0 0.0
    %402 = vmatpush1.msra.mxu0 0.0
    %403 = vmatprep.subr.mxu0 0.0
    %404 = vmatpush1.msra.mxu0 0.0
    %405 = vmatprep.subr.mxu0 0.0
    %406 = vmatpush1.msra.mxu0 0.0
    %407 = vmatprep.subr.mxu0 0.0
    %408 = vmatpush1.msra.mxu0 0.0
    %409 = vmatprep.subr.mxu0 0.0
    %410 = vmatpush1.msra.mxu0 0.0
    %411 = vmatprep.subr.mxu0 0.0
    %412 = vmatpush1.msra.mxu0 0.0
    %413 = vmatprep.subr.mxu0 0.0
    %414 = vmatpush1.msra.mxu0 0.0
    %415 = vmatprep.subr.mxu0 0.0
    %416 = vmatpush1.msra.mxu0 0.0
    %417 = vmatprep.subr.mxu0 0.0
    %418 = vmatpush1.msra.mxu0 0.0
    %419 = vmatprep.subr.mxu0 0.0
    %420 = vmatpush1.msra.mxu0 0.0
    %421 = vmatprep.subr.mxu0 0.0
    %422 = vmatpush1.msra.mxu0 0.0
    %423 = vmatprep.subr.mxu0 0.0
    %424 = vmatpush1.msra.mxu0 0.0
    %425 = vmatprep.subr.mxu0 0.0
    %426 = vmatpush1.msra.mxu0 0.0
    %427 = vmatprep.subr.mxu0 0.0
    %428 = vmatpush1.msra.mxu0 0.0
    %429 = vmatprep.subr.mxu0 0.0
    %430 = vmatpush1.msra.mxu0 0.0
    %431 = vmatprep.subr.mxu0 0.0
    %432 = vmatpush1.msra.mxu0 0.0
    %433 = vmatprep.subr.mxu0 0.0
    %434 = vmatpush1.msra.mxu0 0.0
    %435 = vmatprep.subr.mxu0 0.0
    %436 = vmatpush1.msra.mxu0 0.0
    %437 = vmatprep.subr.mxu0 0.0
    %438 = vmatpush1.msra.mxu0 0.0
    %439 = vmatprep.subr.mxu0 0.0
    %440 = vmatpush1.msra.mxu0 0.0
    %441 = vmatprep.mubr.f32.mxu0 0.0
    %442 = vmatmul.mubr.f32.gmra.mrb[0].mxu0 %v372
    %v443 = vpop.f32.mrb[0].mxu0
    %v444 = vadd.f32 0.0, %v443
    %v445 = vpop.f32.mrb[0].mxu0
    %446 = vmatprep.mubr.f32.mxu0 0.0
    %447 = vmatmul.mubr.f32.gmra.mrb[0].mxu0 %v375
    %v448 = vpop.f32.mrb[0].mxu0
    %v449 = vadd.f32 0.0, %v448
    %v450 = vpop.f32.mrb[0].mxu0
    %451 = vdwg.mxu0
    %v452 = vld [vmem:[%s5] sm:$0x1]
    %v454 = vlaneseq
    %v455 = vshrl.u32 %v454, 7
    %v456 = vsub.s32 0, %v455
    %v457 = vrot.slane %v452, %v456
    %459 = vmatprep.subr.mxu0 0.0
    %460 = vmatpush1.msra.mxu0 %v444
    %461 = vmatprep.subr.mxu0 0.0
    %462 = vmatpush1.msra.mxu0 %v449
    %463 = vmatprep.subr.mxu0 0.0
    %464 = vmatpush1.msra.mxu0 0.0
    %465 = vmatprep.subr.mxu0 0.0
    %466 = vmatpush1.msra.mxu0 0.0
    %467 = vmatprep.subr.mxu0 0.0
    %468 = vmatpush1.msra.mxu0 0.0
    %469 = vmatprep.subr.mxu0 0.0
    %470 = vmatpush1.msra.mxu0 0.0
    %471 = vmatprep.subr.mxu0 0.0
    %472 = vmatpush1.msra.mxu0 0.0
    %473 = vmatprep.subr.mxu0 0.0
    %474 = vmatpush1.msra.mxu0 0.0
    %475 = vmatprep.subr.mxu0 0.0
    %476 = vmatpush1.msra.mxu0 0.0
    %477 = vmatprep.subr.mxu0 0.0
    %478 = vmatpush1.msra.mxu0 0.0
    %479 = vmatprep.subr.mxu0 0.0
    %480 = vmatpush1.msra.mxu0 0.0
    %481 = vmatprep.subr.mxu0 0.0
    %482 = vmatpush1.msra.mxu0 0.0
    %483 = vmatprep.subr.mxu0 0.0
    %484 = vmatpush1.msra.mxu0 0.0
    %485 = vmatprep.subr.mxu0 0.0
    %486 = vmatpush1.msra.mxu0 0.0
    %487 = vmatprep.subr.mxu0 0.0
    %488 = vmatpush1.msra.mxu0 0.0
    %489 = vmatprep.subr.mxu0 0.0
    %490 = vmatpush1.msra.mxu0 0.0
    %491 = vmatprep.subr.mxu0 0.0
    %492 = vmatpush1.msra.mxu0 0.0
    %493 = vmatprep.subr.mxu0 0.0
    %494 = vmatpush1.msra.mxu0 0.0
    %495 = vmatprep.subr.mxu0 0.0
    %496 = vmatpush1.msra.mxu0 0.0
    %497 = vmatprep.subr.mxu0 0.0
    %498 = vmatpush1.msra.mxu0 0.0
    %499 = vmatprep.subr.mxu0 0.0
    %500 = vmatpush1.msra.mxu0 0.0
    %501 = vmatprep.subr.mxu0 0.0
    %502 = vmatpush1.msra.mxu0 0.0
    %503 = vmatprep.subr.mxu0 0.0
    %504 = vmatpush1.msra.mxu0 0.0
    %505 = vmatprep.subr.mxu0 0.0
    %506 = vmatpush1.msra.mxu0 0.0
    %507 = vmatprep.subr.mxu0 0.0
    %508 = vmatpush1.msra.mxu0 0.0
    %509 = vmatprep.subr.mxu0 0.0
    %510 = vmatpush1.msra.mxu0 0.0
    %511 = vmatprep.subr.mxu0 0.0
    %512 = vmatpush1.msra.mxu0 0.0
    %513 = vmatprep.subr.mxu0 0.0
    %514 = vmatpush1.msra.mxu0 0.0
    %515 = vmatprep.subr.mxu0 0.0
    %516 = vmatpush1.msra.mxu0 0.0
    %517 = vmatprep.subr.mxu0 0.0
    %518 = vmatpush1.msra.mxu0 0.0
    %519 = vmatprep.subr.mxu0 0.0
    %520 = vmatpush1.msra.mxu0 0.0
    %521 = vmatprep.subr.mxu0 0.0
    %522 = vmatpush1.msra.mxu0 0.0
    %523 = vmatprep.mubr.f32.mxu0 0.0
    %524 = vmatmul.mubr.f32.gmra.mrb[0].mxu0 %v285
    %v525 = vpop.f32.mrb[0].mxu0
    %v526 = vadd.f32 %v457, %v525
    %v527 = vpop.f32.mrb[0].mxu0
    %528 = vmatprep.mubr.f32.mxu0 0.0
    %529 = vmatmul.mubr.f32.gmra.mrb[0].mxu0 %v288
    %v530 = vpop.f32.mrb[0].mxu0
    %v531 = vadd.f32 %v457, %v530
    %v532 = vpop.f32.mrb[0].mxu0
    %533 = vdwg.mxu0
    %v534 = vmax.f32 %v526, 0.0
    %v535 = vmax.f32 %v531, 0.0
    %v536 = vld [vmem:[#allocation9] sm:$0xff]
    %v537 = vld [vmem:[#allocation9 + $0x8] sm:$0xff]
    %v538 = vld [vmem:[#allocation9 + $0x10] sm:$0xff]
    %v539 = vld [vmem:[#allocation9 + $0x18] sm:$0xff]
    %v541 = vsel %vm194, %v534, 0
    %v544 = vsel %vm194, %v535, 0
    %546 = vmatprep.subr.mxu0 0.0
    %547 = vmatpush1.msra.mxu0 %v536
    %548 = vmatprep.subr.mxu0 0.0
    %549 = vmatpush1.msra.mxu0 %v537
    %550 = vmatprep.subr.mxu0 0.0
    %551 = vmatpush1.msra.mxu0 %v538
    %552 = vmatprep.subr.mxu0 0.0
    %553 = vmatpush1.msra.mxu0 %v539
    %554 = vmatprep.subr.mxu0 0.0
    %555 = vmatpush1.msra.mxu0 0.0
    %556 = vmatprep.subr.mxu0 0.0
    %557 = vmatpush1.msra.mxu0 0.0
    %558 = vmatprep.subr.mxu0 0.0
    %559 = vmatpush1.msra.mxu0 0.0
    %560 = vmatprep.subr.mxu0 0.0
    %561 = vmatpush1.msra.mxu0 0.0
    %562 = vmatprep.subr.mxu0 0.0
    %563 = vmatpush1.msra.mxu0 0.0
    %564 = vmatprep.subr.mxu0 0.0
    %565 = vmatpush1.msra.mxu0 0.0
    %566 = vmatprep.subr.mxu0 0.0
    %567 = vmatpush1.msra.mxu0 0.0
    %568 = vmatprep.subr.mxu0 0.0
    %569 = vmatpush1.msra.mxu0 0.0
    %570 = vmatprep.subr.mxu0 0.0
    %571 = vmatpush1.msra.mxu0 0.0
    %572 = vmatprep.subr.mxu0 0.0
    %573 = vmatpush1.msra.mxu0 0.0
    %574 = vmatprep.subr.mxu0 0.0
    %575 = vmatpush1.msra.mxu0 0.0
    %576 = vmatprep.subr.mxu0 0.0
    %577 = vmatpush1.msra.mxu0 0.0
    %578 = vmatprep.subr.mxu0 0.0
    %579 = vmatpush1.msra.mxu0 0.0
    %580 = vmatprep.subr.mxu0 0.0
    %581 = vmatpush1.msra.mxu0 0.0
    %582 = vmatprep.subr.mxu0 0.0
    %583 = vmatpush1.msra.mxu0 0.0
    %584 = vmatprep.subr.mxu0 0.0
    %585 = vmatpush1.msra.mxu0 0.0
    %586 = vmatprep.subr.mxu0 0.0
    %587 = vmatpush1.msra.mxu0 0.0
    %588 = vmatprep.subr.mxu0 0.0
    %589 = vmatpush1.msra.mxu0 0.0
    %590 = vmatprep.subr.mxu0 0.0
    %591 = vmatpush1.msra.mxu0 0.0
    %592 = vmatprep.subr.mxu0 0.0
    %593 = vmatpush1.msra.mxu0 0.0
    %594 = vmatprep.subr.mxu0 0.0
    %595 = vmatpush1.msra.mxu0 0.0
    %596 = vmatprep.subr.mxu0 0.0
    %597 = vmatpush1.msra.mxu0 0.0
    %598 = vmatprep.subr.mxu0 0.0
    %599 = vmatpush1.msra.mxu0 0.0
    %600 = vmatprep.subr.mxu0 0.0
    %601 = vmatpush1.msra.mxu0 0.0
    %602 = vmatprep.subr.mxu0 0.0
    %603 = vmatpush1.msra.mxu0 0.0
    %604 = vmatprep.subr.mxu0 0.0
    %605 = vmatpush1.msra.mxu0 0.0
    %606 = vmatprep.subr.mxu0 0.0
    %607 = vmatpush1.msra.mxu0 0.0
    %608 = vmatprep.subr.mxu0 0.0
    %609 = vmatpush1.msra.mxu0 0.0
    %610 = vmatprep.mubr.f32.mxu0 0.0
    %611 = vmatmul.mubr.f32.gmra.mrb[0].mxu0 %v541
    %v612 = vpop.f32.mrb[0].mxu0
    %v613 = vadd.f32 0.0, %v612
    %v614 = vpop.f32.mrb[0].mxu0
    %615 = vmatprep.mubr.f32.mxu0 0.0
    %616 = vmatmul.mubr.f32.gmra.mrb[0].mxu0 %v544
    %v617 = vpop.f32.mrb[0].mxu0
    %v618 = vadd.f32 0.0, %v617
    %v619 = vpop.f32.mrb[0].mxu0
    %620 = vdwg.mxu0
    %v621 = vld [vmem:[#allocation10] sm:$0x1]
    %v623 = vlaneseq
    %v624 = vshrl.u32 %v623, 7
    %v625 = vsub.s32 0, %v624
    %v626 = vrot.slane %v621, %v625
    %628 = vmatprep.subr.mxu0 0.0
    %629 = vmatpush1.msra.mxu0 %v613
    %630 = vmatprep.subr.mxu0 0.0
    %631 = vmatpush1.msra.mxu0 %v618
    %632 = vmatprep.subr.mxu0 0.0
    %633 = vmatpush1.msra.mxu0 0.0
    %634 = vmatprep.subr.mxu0 0.0
    %635 = vmatpush1.msra.mxu0 0.0
    %636 = vmatprep.subr.mxu0 0.0
    %637 = vmatpush1.msra.mxu0 0.0
    %638 = vmatprep.subr.mxu0 0.0
    %639 = vmatpush1.msra.mxu0 0.0
    %640 = vmatprep.subr.mxu0 0.0
    %641 = vmatpush1.msra.mxu0 0.0
    %642 = vmatprep.subr.mxu0 0.0
    %643 = vmatpush1.msra.mxu0 0.0
    %644 = vmatprep.subr.mxu0 0.0
    %645 = vmatpush1.msra.mxu0 0.0
    %646 = vmatprep.subr.mxu0 0.0
    %647 = vmatpush1.msra.mxu0 0.0
    %648 = vmatprep.subr.mxu0 0.0
    %649 = vmatpush1.msra.mxu0 0.0
    %650 = vmatprep.subr.mxu0 0.0
    %651 = vmatpush1.msra.mxu0 0.0
    %652 = vmatprep.subr.mxu0 0.0
    %653 = vmatpush1.msra.mxu0 0.0
    %654 = vmatprep.subr.mxu0 0.0
    %655 = vmatpush1.msra.mxu0 0.0
    %656 = vmatprep.subr.mxu0 0.0
    %657 = vmatpush1.msra.mxu0 0.0
    %658 = vmatprep.subr.mxu0 0.0
    %659 = vmatpush1.msra.mxu0 0.0
    %660 = vmatprep.subr.mxu0 0.0
    %661 = vmatpush1.msra.mxu0 0.0
    %662 = vmatprep.subr.mxu0 0.0
    %663 = vmatpush1.msra.mxu0 0.0
    %664 = vmatprep.subr.mxu0 0.0
    %665 = vmatpush1.msra.mxu0 0.0
    %666 = vmatprep.subr.mxu0 0.0
    %667 = vmatpush1.msra.mxu0 0.0
    %668 = vmatprep.subr.mxu0 0.0
    %669 = vmatpush1.msra.mxu0 0.0
    %670 = vmatprep.subr.mxu0 0.0
    %671 = vmatpush1.msra.mxu0 0.0
    %672 = vmatprep.subr.mxu0 0.0
    %673 = vmatpush1.msra.mxu0 0.0
    %674 = vmatprep.subr.mxu0 0.0
    %675 = vmatpush1.msra.mxu0 0.0
    %676 = vmatprep.subr.mxu0 0.0
    %677 = vmatpush1.msra.mxu0 0.0
    %678 = vmatprep.subr.mxu0 0.0
    %679 = vmatpush1.msra.mxu0 0.0
    %680 = vmatprep.subr.mxu0 0.0
    %681 = vmatpush1.msra.mxu0 0.0
    %682 = vmatprep.subr.mxu0 0.0
    %683 = vmatpush1.msra.mxu0 0.0
    %684 = vmatprep.subr.mxu0 0.0
    %685 = vmatpush1.msra.mxu0 0.0
    %686 = vmatprep.subr.mxu0 0.0
    %687 = vmatpush1.msra.mxu0 0.0
    %688 = vmatprep.subr.mxu0 0.0
    %689 = vmatpush1.msra.mxu0 0.0
    %690 = vmatprep.subr.mxu0 0.0
    %691 = vmatpush1.msra.mxu0 0.0
    %692 = vmatprep.mubr.f32.mxu0 0.0
    %693 = vmatmul.mubr.f32.gmra.mrb[0].mxu0 %v285
    %v694 = vpop.f32.mrb[0].mxu0
    %v695 = vadd.f32 %v626, %v694
    %v696 = vpop.f32.mrb[0].mxu0
    %697 = vmatprep.mubr.f32.mxu0 0.0
    %698 = vmatmul.mubr.f32.gmra.mrb[0].mxu0 %v288
    %v699 = vpop.f32.mrb[0].mxu0
    %v700 = vadd.f32 %v626, %v699
    %v701 = vpop.f32.mrb[0].mxu0
    %702 = vdwg.mxu0
    %v703 = vmax.f32 %v695, 0.0
    %v704 = vmax.f32 %v700, 0.0
    %v705 = vld [vmem:[#allocation12] sm:$0xff]
    %v706 = vld [vmem:[#allocation12 + $0x8] sm:$0xff]
    %v707 = vld [vmem:[#allocation12 + $0x10] sm:$0xff]
    %v708 = vld [vmem:[#allocation12 + $0x18] sm:$0xff]
    %v709 = vld [vmem:[#allocation13] sm:$0x1]
    %v711 = vlaneseq
    %v712 = vshrl.u32 %v711, 7
    %v713 = vsub.s32 0, %v712
    %v714 = vrot.slane %v709, %v713
    %v717 = vsel %vm194, %v703, 0
    %v720 = vsel %vm194, %v704, 0
    %722 = vmatprep.subr.mxu0 0.0
    %723 = vmatpush1.msra.mxu0 %v705
    %724 = vmatprep.subr.mxu0 0.0
    %725 = vmatpush1.msra.mxu0 %v706
    %726 = vmatprep.subr.mxu0 0.0
    %727 = vmatpush1.msra.mxu0 %v707
    %728 = vmatprep.subr.mxu0 0.0
    %729 = vmatpush1.msra.mxu0 %v708
    %730 = vmatprep.subr.mxu0 0.0
    %731 = vmatpush1.msra.mxu0 0.0
    %732 = vmatprep.subr.mxu0 0.0
    %733 = vmatpush1.msra.mxu0 0.0
    %734 = vmatprep.subr.mxu0 0.0
    %735 = vmatpush1.msra.mxu0 0.0
    %736 = vmatprep.subr.mxu0 0.0
    %737 = vmatpush1.msra.mxu0 0.0
    %738 = vmatprep.subr.mxu0 0.0
    %739 = vmatpush1.msra.mxu0 0.0
    %740 = vmatprep.subr.mxu0 0.0
    %741 = vmatpush1.msra.mxu0 0.0
    %742 = vmatprep.subr.mxu0 0.0
    %743 = vmatpush1.msra.mxu0 0.0
    %744 = vmatprep.subr.mxu0 0.0
    %745 = vmatpush1.msra.mxu0 0.0
    %746 = vmatprep.subr.mxu0 0.0
    %747 = vmatpush1.msra.mxu0 0.0
    %748 = vmatprep.subr.mxu0 0.0
    %749 = vmatpush1.msra.mxu0 0.0
    %750 = vmatprep.subr.mxu0 0.0
    %751 = vmatpush1.msra.mxu0 0.0
    %752 = vmatprep.subr.mxu0 0.0
    %753 = vmatpush1.msra.mxu0 0.0
    %754 = vmatprep.subr.mxu0 0.0
    %755 = vmatpush1.msra.mxu0 0.0
    %756 = vmatprep.subr.mxu0 0.0
    %757 = vmatpush1.msra.mxu0 0.0
    %758 = vmatprep.subr.mxu0 0.0
    %759 = vmatpush1.msra.mxu0 0.0
    %760 = vmatprep.subr.mxu0 0.0
    %761 = vmatpush1.msra.mxu0 0.0
    %762 = vmatprep.subr.mxu0 0.0
    %763 = vmatpush1.msra.mxu0 0.0
    %764 = vmatprep.subr.mxu0 0.0
    %765 = vmatpush1.msra.mxu0 0.0
    %766 = vmatprep.subr.mxu0 0.0
    %767 = vmatpush1.msra.mxu0 0.0
    %768 = vmatprep.subr.mxu0 0.0
    %769 = vmatpush1.msra.mxu0 0.0
    %770 = vmatprep.subr.mxu0 0.0
    %771 = vmatpush1.msra.mxu0 0.0
    %772 = vmatprep.subr.mxu0 0.0
    %773 = vmatpush1.msra.mxu0 0.0
    %774 = vmatprep.subr.mxu0 0.0
    %775 = vmatpush1.msra.mxu0 0.0
    %776 = vmatprep.subr.mxu0 0.0
    %777 = vmatpush1.msra.mxu0 0.0
    %778 = vmatprep.subr.mxu0 0.0
    %779 = vmatpush1.msra.mxu0 0.0
    %780 = vmatprep.subr.mxu0 0.0
    %781 = vmatpush1.msra.mxu0 0.0
    %782 = vmatprep.subr.mxu0 0.0
    %783 = vmatpush1.msra.mxu0 0.0
    %784 = vmatprep.subr.mxu0 0.0
    %785 = vmatpush1.msra.mxu0 0.0
    %786 = vmatprep.mubr.f32.mxu0 0.0
    %787 = vmatmul.mubr.f32.gmra.mrb[0].mxu0 %v717
    %v788 = vpop.f32.mrb[0].mxu0
    %v789 = vadd.f32 %v714, %v788
    %v790 = vpop.f32.mrb[0].mxu0
    %791 = vmatprep.mubr.f32.mxu0 0.0
    %792 = vmatmul.mubr.f32.gmra.mrb[0].mxu0 %v720
    %v793 = vpop.f32.mrb[0].mxu0
    %v794 = vadd.f32 %v714, %v793
    %v795 = vpop.f32.mrb[0].mxu0
    %796 = vdwg.mxu0
    %v797 = vmax.f32 %v789, 0.0
    %v798 = vmax.f32 %v794, 0.0
    %v799 = vld [vmem:[%s10] sm:$0xff]
    %v800 = vld [vmem:[%s10 + $0x8] sm:$0xff]
    %v801 = vld [vmem:[%s10 + $0x10] sm:$0xff]
    %v802 = vld [vmem:[%s10 + $0x18] sm:$0xff]
    %v803 = vld [vmem:[#allocation15] sm:$0x1]
    %v805 = vlaneseq
    %v806 = vshrl.u32 %v805, 7
    %v807 = vsub.s32 0, %v806
    %v808 = vrot.slane %v803, %v807
    %v811 = vsel %vm194, %v797, 0
    %v814 = vsel %vm194, %v798, 0
    %816 = vmatprep.subr.mxu0 0.0
    %817 = vmatpush1.msra.mxu0 %v799
    %818 = vmatprep.subr.mxu0 0.0
    %819 = vmatpush1.msra.mxu0 %v800
    %820 = vmatprep.subr.mxu0 0.0
    %821 = vmatpush1.msra.mxu0 %v801
    %822 = vmatprep.subr.mxu0 0.0
    %823 = vmatpush1.msra.mxu0 %v802
    %824 = vmatprep.subr.mxu0 0.0
    %825 = vmatpush1.msra.mxu0 0.0
    %826 = vmatprep.subr.mxu0 0.0
    %827 = vmatpush1.msra.mxu0 0.0
    %828 = vmatprep.subr.mxu0 0.0
    %829 = vmatpush1.msra.mxu0 0.0
    %830 = vmatprep.subr.mxu0 0.0
    %831 = vmatpush1.msra.mxu0 0.0
    %832 = vmatprep.subr.mxu0 0.0
    %833 = vmatpush1.msra.mxu0 0.0
    %834 = vmatprep.subr.mxu0 0.0
    %835 = vmatpush1.msra.mxu0 0.0
    %836 = vmatprep.subr.mxu0 0.0
    %837 = vmatpush1.msra.mxu0 0.0
    %838 = vmatprep.subr.mxu0 0.0
    %839 = vmatpush1.msra.mxu0 0.0
    %840 = vmatprep.subr.mxu0 0.0
    %841 = vmatpush1.msra.mxu0 0.0
    %842 = vmatprep.subr.mxu0 0.0
    %843 = vmatpush1.msra.mxu0 0.0
    %844 = vmatprep.subr.mxu0 0.0
    %845 = vmatpush1.msra.mxu0 0.0
    %846 = vmatprep.subr.mxu0 0.0
    %847 = vmatpush1.msra.mxu0 0.0
    %848 = vmatprep.subr.mxu0 0.0
    %849 = vmatpush1.msra.mxu0 0.0
    %850 = vmatprep.subr.mxu0 0.0
    %851 = vmatpush1.msra.mxu0 0.0
    %852 = vmatprep.subr.mxu0 0.0
    %853 = vmatpush1.msra.mxu0 0.0
    %854 = vmatprep.subr.mxu0 0.0
    %855 = vmatpush1.msra.mxu0 0.0
    %856 = vmatprep.subr.mxu0 0.0
    %857 = vmatpush1.msra.mxu0 0.0
    %858 = vmatprep.subr.mxu0 0.0
    %859 = vmatpush1.msra.mxu0 0.0
    %860 = vmatprep.subr.mxu0 0.0
    %861 = vmatpush1.msra.mxu0 0.0
    %862 = vmatprep.subr.mxu0 0.0
    %863 = vmatpush1.msra.mxu0 0.0
    %864 = vmatprep.subr.mxu0 0.0
    %865 = vmatpush1.msra.mxu0 0.0
    %866 = vmatprep.subr.mxu0 0.0
    %867 = vmatpush1.msra.mxu0 0.0
    %868 = vmatprep.subr.mxu0 0.0
    %869 = vmatpush1.msra.mxu0 0.0
    %870 = vmatprep.subr.mxu0 0.0
    %871 = vmatpush1.msra.mxu0 0.0
    %872 = vmatprep.subr.mxu0 0.0
    %873 = vmatpush1.msra.mxu0 0.0
    %874 = vmatprep.subr.mxu0 0.0
    %875 = vmatpush1.msra.mxu0 0.0
    %876 = vmatprep.subr.mxu0 0.0
    %877 = vmatpush1.msra.mxu0 0.0
    %878 = vmatprep.subr.mxu0 0.0
    %879 = vmatpush1.msra.mxu0 0.0
    %880 = vmatprep.mubr.f32.mxu0 0.0
    %881 = vmatmul.mubr.f32.gmra.mrb[0].mxu0 %v811
    %v882 = vpop.f32.mrb[0].mxu0
    %v883 = vadd.f32 %v808, %v882
    %v884 = vpop.f32.mrb[0].mxu0
    %885 = vmatprep.mubr.f32.mxu0 0.0
    %886 = vmatmul.mubr.f32.gmra.mrb[0].mxu0 %v814
    %v887 = vpop.f32.mrb[0].mxu0
    %v888 = vadd.f32 %v808, %v887
    %v889 = vpop.f32.mrb[0].mxu0
    %890 = vdwg.mxu0
    %v891 = vmax.f32 %v883, 0.0
    %v892 = vmax.f32 %v888, 0.0
    %v893 = vld [vmem:[#allocation16] sm:$0xff]
    %v894 = vld [vmem:[#allocation16 + $0x8] sm:$0xff]
    %v895 = vld [vmem:[#allocation16 + $0x10] sm:$0xff]
    %v896 = vld [vmem:[#allocation16 + $0x18] sm:$0xff]
    %v897 = vld [vmem:[#allocation18] sm:$0x1]
    %v899 = vlaneseq
    %v900 = vshrl.u32 %v899, 7
    %v901 = vsub.s32 0, %v900
    %v902 = vrot.slane %v897, %v901
    %v905 = vsel %vm194, %v891, 0
    %v908 = vsel %vm194, %v892, 0
    %910 = vmatprep.subr.mxu0 0.0
    %911 = vmatpush1.msra.mxu0 %v893
    %912 = vmatprep.subr.mxu0 0.0
    %913 = vmatpush1.msra.mxu0 %v894
    %914 = vmatprep.subr.mxu0 0.0
    %915 = vmatpush1.msra.mxu0 %v895
    %916 = vmatprep.subr.mxu0 0.0
    %917 = vmatpush1.msra.mxu0 %v896
    %918 = vmatprep.subr.mxu0 0.0
    %919 = vmatpush1.msra.mxu0 0.0
    %920 = vmatprep.subr.mxu0 0.0
    %921 = vmatpush1.msra.mxu0 0.0
    %922 = vmatprep.subr.mxu0 0.0
    %923 = vmatpush1.msra.mxu0 0.0
    %924 = vmatprep.subr.mxu0 0.0
    %925 = vmatpush1.msra.mxu0 0.0
    %926 = vmatprep.subr.mxu0 0.0
    %927 = vmatpush1.msra.mxu0 0.0
    %928 = vmatprep.subr.mxu0 0.0
    %929 = vmatpush1.msra.mxu0 0.0
    %930 = vmatprep.subr.mxu0 0.0
    %931 = vmatpush1.msra.mxu0 0.0
    %932 = vmatprep.subr.mxu0 0.0
    %933 = vmatpush1.msra.mxu0 0.0
    %934 = vmatprep.subr.mxu0 0.0
    %935 = vmatpush1.msra.mxu0 0.0
    %936 = vmatprep.subr.mxu0 0.0
    %937 = vmatpush1.msra.mxu0 0.0
    %938 = vmatprep.subr.mxu0 0.0
    %939 = vmatpush1.msra.mxu0 0.0
    %940 = vmatprep.subr.mxu0 0.0
    %941 = vmatpush1.msra.mxu0 0.0
    %942 = vmatprep.subr.mxu0 0.0
    %943 = vmatpush1.msra.mxu0 0.0
    %944 = vmatprep.subr.mxu0 0.0
    %945 = vmatpush1.msra.mxu0 0.0
    %946 = vmatprep.subr.mxu0 0.0
    %947 = vmatpush1.msra.mxu0 0.0
    %948 = vmatprep.subr.mxu0 0.0
    %949 = vmatpush1.msra.mxu0 0.0
    %950 = vmatprep.subr.mxu0 0.0
    %951 = vmatpush1.msra.mxu0 0.0
    %952 = vmatprep.subr.mxu0 0.0
    %953 = vmatpush1.msra.mxu0 0.0
    %954 = vmatprep.subr.mxu0 0.0
    %955 = vmatpush1.msra.mxu0 0.0
    %956 = vmatprep.subr.mxu0 0.0
    %957 = vmatpush1.msra.mxu0 0.0
    %958 = vmatprep.subr.mxu0 0.0
    %959 = vmatpush1.msra.mxu0 0.0
    %960 = vmatprep.subr.mxu0 0.0
    %961 = vmatpush1.msra.mxu0 0.0
    %962 = vmatprep.subr.mxu0 0.0
    %963 = vmatpush1.msra.mxu0 0.0
    %964 = vmatprep.subr.mxu0 0.0
    %965 = vmatpush1.msra.mxu0 0.0
    %966 = vmatprep.subr.mxu0 0.0
    %967 = vmatpush1.msra.mxu0 0.0
    %968 = vmatprep.subr.mxu0 0.0
    %969 = vmatpush1.msra.mxu0 0.0
    %970 = vmatprep.subr.mxu0 0.0
    %971 = vmatpush1.msra.mxu0 0.0
    %972 = vmatprep.subr.mxu0 0.0
    %973 = vmatpush1.msra.mxu0 0.0
    %974 = vmatprep.mubr.f32.mxu0 0.0
    %975 = vmatmul.mubr.f32.gmra.mrb[0].mxu0 %v905
    %v976 = vpop.f32.mrb[0].mxu0
    %v977 = vadd.f32 %v902, %v976
    %v978 = vpop.f32.mrb[0].mxu0
    %979 = vmatprep.mubr.f32.mxu0 0.0
    %980 = vmatmul.mubr.f32.gmra.mrb[0].mxu0 %v908
    %v981 = vpop.f32.mrb[0].mxu0
    %v982 = vadd.f32 %v902, %v981
    %v983 = vpop.f32.mrb[0].mxu0
    %984 = vdwg.mxu0
    %985 = vst [vmem:[%s14] sm:$0xff] %v977
    %986 = vst [vmem:[%s14 + $0x8] sm:$0xff] %v982
    // Predicated region
    $region102: #{net_forward.1} parent=1 // pred_check
      _
    $region103: #{net_forward.1} parent=1 // pred_check_branch
      %988 = sbr.rel (0) target = $region105
    $region104: #{net_forward.1} parent=1 // pred_region
      _
    $region105: #{net_forward.1} parent=1 // pred_fallthru
      _
    // Predicated region
    $region106: #{net_forward.1} parent=1 // pred_check
      _
    $region107: #{net_forward.1} parent=1 // pred_check_branch
      %990 = sbr.rel (0) target = $region109
    $region108: #{net_forward.1} parent=1 // pred_region
      _
    $region109: #{net_forward.1} parent=1 // pred_fallthru
      _
    %991 = vsyncpa [#allocation3], 1
    %992 = vsyncpa [#allocation5], 1
    %993 = vsyncpa [#allocation8], 1
    %994 = vsyncpa [#allocation11], 1
    %995 = vsyncpa [#allocation14], 1
    %996 = vsyncpa [#allocation17], 1

</llo_original>
